<compile_context>
chip_gen: v7x
topology: tpu7x:2x2x1
jax: 0.10.0
libtpu: 0.0.40
codegen_flags: <defaults>
</compile_context>

<pallas_src>
import functools

import jax
import jax.numpy as jnp
from jax.experimental import pallas as pl
from jax.experimental.pallas import tpu as pltpu

EPS = 1e-5


# ---------------------------------------------------------------------------
# Fused Pallas kernel: the whole Bottleneck stack for one batch element
# ---------------------------------------------------------------------------
def _mbconv_stack_kernel(x_ref, *refs, n_layers, strides, residuals):
    """Inputs per layer (BN/bias pre-folded on the wrapper side):
         w1   (Cin, CE)   1x1 expand conv  (x BN0 scale)        -> MXU
         w3   (CE, Cout)  1x1 project conv (x final-BN scale)   -> MXU
         vecs (5, CE)     rows 0..2: depthwise taps (x BN1 scale)
                          row 3: shift0 (= b1*s0+t0), row 4: shift1 (= b2*s1+t1)
         sh2  (1, Cout)   shift2 (= b3*sf+tf)
       Scratch: dw_scr (L+2, CE) f32 halo buffer for the k=3 depthwise conv
       and the stride-2 downsample.
    """
    w_refs = refs[: 4 * n_layers]
    out_ref = refs[4 * n_layers]
    dw_scr = refs[4 * n_layers + 1]

    # Zero the two halo rows once; inner writes only touch rows 1..L.
    ce_scr = dw_scr.shape[1]
    l_pad = dw_scr.shape[0]                       # L + 2
    zrow = jnp.zeros((1, ce_scr), jnp.float32)
    dw_scr[0:1, :] = zrow
    dw_scr[l_pad - 1:l_pad, :] = zrow

    x = x_ref[0].astype(jnp.float32)              # (L, Cin)

    for i in range(n_layers):
        w1_ref, w3_ref, vec_ref, sh2_ref = w_refs[4 * i: 4 * i + 4]
        stride = strides[i]
        vecs = vec_ref[...]                       # (5, CE) f32

        # ---- conv1 (1x1) + folded BN0 + ReLU6 : MXU matmul ----------------
        y = jnp.dot(x.astype(w1_ref.dtype), w1_ref[...],
                    preferred_element_type=jnp.float32)
        y = jnp.clip(y + vecs[3:4, :], 0.0, 6.0)  # (L, CE)
        L = y.shape[0]

        # ---- depthwise conv k=3, pad=1 (BN1 folded into taps/shift) -------
        # Stage y into the halo scratch (rows 1..L); rows 0 and L+1 are zero.
        dw_scr[pl.ds(1, L), :] = y
        if stride == 1:
            y_m1 = dw_scr[pl.ds(0, L), :]         # y[l-1]
            y_ct = y                              # y[l]
            y_p1 = dw_scr[pl.ds(2, L), :]         # y[l+1]
        else:
            # stride-2: read the three taps already downsampled
            # (strided sublane reads), valid for both even and odd L.
            Lo = (L - 1) // 2 + 1
            y_m1 = dw_scr[pl.ds(0, Lo, stride=2), :]   # y[2j-1]
            y_ct = dw_scr[pl.ds(1, Lo, stride=2), :]   # y[2j]
            y_p1 = dw_scr[pl.ds(2, Lo, stride=2), :]   # y[2j+1]
        z = jnp.clip(y_m1 * vecs[0:1, :] + y_ct * vecs[1:2, :]
                     + y_p1 * vecs[2:3, :] + vecs[4:5, :], 0.0, 6.0)

        # ---- conv3 (1x1) + folded bias [+ final MBConv BN] : MXU matmul ---
        o = jnp.dot(z.astype(w3_ref.dtype), w3_ref[...],
                    preferred_element_type=jnp.float32) + sh2_ref[...]

        if residuals[i]:
            o = x + o          # nn.Dropout() is identity in eval mode
        x = o

    out_ref[0] = x.astype(out_ref.dtype)


def _const_spec(a):
    # Full-array block, constant block index (weights are grid-invariant).
    return pl.BlockSpec(a.shape, lambda n: (0, 0))


# ---------------------------------------------------------------------------
# Wrapper: fold BN/bias into weights and launch ONE pallas_call for the stack
# ---------------------------------------------------------------------------
def mbconv_forward(x_nlc, params, *, matmul_dtype=jnp.bfloat16):
    """Full MBConv forward.  x_nlc: (N, L, C_in) channels-last."""
    N, L, Cin = x_nlc.shape
    layers = params["layers"]
    n_layers = len(layers)

    CE = layers[0]["w2"].shape[1]
    assert all(p["w2"].shape[1] == CE for p in layers), "expansion width must match"

    strides, residuals = [], []
    args = [x_nlc]
    in_specs = [pl.BlockSpec((1, L, Cin), lambda n: (n, 0, 0))]

    for i, p in enumerate(layers):
        last = i == n_layers - 1
        stride = 2 if last else 1
        cout = p["w3"].shape[1]
        if last:
            sf = jnp.asarray(params["final_scale"], jnp.float32)
            tf = jnp.asarray(params["final_shift"], jnp.float32)
        else:
            sf = jnp.ones((cout,), jnp.float32)
            tf = jnp.zeros((cout,), jnp.float32)
        s0, t0, s1, t1 = p["s0"], p["t0"], p["s1"], p["t1"]

        # Exact constant folding of bias + BN into weights / shift vectors.
        w1f = (p["w1"] * s0[None, :]).astype(matmul_dtype)            # (Cin, CE)
        w3f = (p["w3"] * sf[None, :]).astype(matmul_dtype)            # (CE, Cout)
        vecs = jnp.concatenate(
            [p["w2"] * s1[None, :],                                   # 3 dw taps
             (p["b1"] * s0 + t0)[None, :],                            # shift0
             (p["b2"] * s1 + t1)[None, :]],                           # shift1
            axis=0).astype(jnp.float32)                               # (5, CE)
        sh2 = (p["b3"] * sf + tf).reshape(1, -1).astype(jnp.float32)  # (1, Cout)

        for a in (w1f, w3f, vecs, sh2):
            args.append(a)
            in_specs.append(_const_spec(a))
        strides.append(stride)
        residuals.append(not last)

    cout_last = layers[-1]["w3"].shape[1]
    L_out = (L - 1) // 2 + 1          # last layer: k=3, pad=1, stride=2

    kernel = functools.partial(_mbconv_stack_kernel, n_layers=n_layers,
                               strides=tuple(strides),
                               residuals=tuple(residuals))
    return pl.pallas_call(
        kernel,
        out_shape=jax.ShapeDtypeStruct((N, L_out, cout_last), x_nlc.dtype),
        grid=(N,),
        in_specs=in_specs,
        out_specs=pl.BlockSpec((1, L_out, cout_last), lambda n: (n, 0, 0)),
        scratch_shapes=[pltpu.VMEM((L + 2, CE), jnp.float32)],
        compiler_params=pltpu.CompilerParams(
            dimension_semantics=("parallel",),
            vmem_limit_bytes=48 * 1024 * 1024),   # > default; < v7x physical
    )(*args)


# ---------------------------------------------------------------------------
# Deterministic parameter construction (synthetic, eval-mode BN folded)
# ---------------------------------------------------------------------------
def _fold_bn(gamma, beta, rmean, rvar):
    scale = gamma / jnp.sqrt(rvar + EPS)
    shift = beta - rmean * scale
    return scale, shift


def make_params(key, in_ch, out_ch, expansion, layers):
    specs = [(in_ch, in_ch)] * (layers - 1) + [(in_ch, out_ch)]
    layer_params = []
    for cin, cout in specs:
        ce = cin * expansion
        key, *ks = jax.random.split(key, 15)
        ks = iter(ks)
        w1 = 0.3 * jax.random.normal(next(ks), (cin, ce), jnp.float32)
        b1 = 0.1 * jax.random.normal(next(ks), (ce,), jnp.float32)
        s0, t0 = _fold_bn(
            1.0 + 0.1 * jax.random.normal(next(ks), (ce,), jnp.float32),
            0.1 * jax.random.normal(next(ks), (ce,), jnp.float32),
            0.1 * jax.random.normal(next(ks), (ce,), jnp.float32),
            jax.random.uniform(next(ks), (ce,), jnp.float32, 0.5, 1.5))
        w2 = 0.3 * jax.random.normal(next(ks), (3, ce), jnp.float32)
        b2 = 0.1 * jax.random.normal(next(ks), (ce,), jnp.float32)
        s1, t1 = _fold_bn(
            1.0 + 0.1 * jax.random.normal(next(ks), (ce,), jnp.float32),
            0.1 * jax.random.normal(next(ks), (ce,), jnp.float32),
            0.1 * jax.random.normal(next(ks), (ce,), jnp.float32),
            jax.random.uniform(next(ks), (ce,), jnp.float32, 0.5, 1.5))
        w3 = 0.3 * jax.random.normal(next(ks), (ce, cout), jnp.float32)
        b3 = 0.1 * jax.random.normal(next(ks), (cout,), jnp.float32)
        layer_params.append(dict(w1=w1, b1=b1, s0=s0, t0=t0, w2=w2, b2=b2,
                                 s1=s1, t1=t1, w3=w3, b3=b3))
    key, k1, k2, k3, k4 = jax.random.split(key, 5)
    fs, ft = _fold_bn(
        1.0 + 0.1 * jax.random.normal(k1, (out_ch,), jnp.float32),
        0.1 * jax.random.normal(k2, (out_ch,), jnp.float32),
        0.1 * jax.random.normal(k3, (out_ch,), jnp.float32),
        jax.random.uniform(k4, (out_ch,), jnp.float32, 0.5, 1.5))
    return dict(layers=layer_params, final_scale=fs, final_shift=ft)


# ---------------------------------------------------------------------------
# Pure-JAX reference (lax.conv, mirrors the PyTorch NCL forward exactly)
# ---------------------------------------------------------------------------
def _ref_bottleneck(x_ncl, p, stride, residual):
    dn = ("NCH", "OIH", "NCH")
    w1 = jnp.transpose(p["w1"])[:, :, None]                   # (CE, C, 1)
    y = jax.lax.conv_general_dilated(x_ncl, w1, (1,), "VALID",
                                     dimension_numbers=dn)
    y = y + p["b1"][None, :, None]
    y = jnp.clip(y * p["s0"][None, :, None] + p["t0"][None, :, None], 0.0, 6.0)
    ce = y.shape[1]
    w2 = jnp.transpose(p["w2"])[:, None, :]                   # (CE, 1, 3)
    z = jax.lax.conv_general_dilated(y, w2, (stride,), [(1, 1)],
                                     dimension_numbers=dn,
                                     feature_group_count=ce)
    z = z + p["b2"][None, :, None]
    z = jnp.clip(z * p["s1"][None, :, None] + p["t1"][None, :, None], 0.0, 6.0)
    w3 = jnp.transpose(p["w3"])[:, :, None]                   # (Cout, CE, 1)
    o = jax.lax.conv_general_dilated(z, w3, (1,), "VALID",
                                     dimension_numbers=dn)
    o = o + p["b3"][None, :, None]
    if residual:
        o = x_ncl + o
    return o


def ref_mbconv(x_ncl, params):
    y = x_ncl
    n = len(params["layers"])
    for i, p in enumerate(params["layers"]):
        last = i == n - 1
        y = _ref_bottleneck(y, p, 2 if last else 1, residual=not last)
    return (y * params["final_scale"][None, :, None]
            + params["final_shift"][None, :, None])


# ---------------------------------------------------------------------------
if __name__ == "__main__":
    key = jax.random.PRNGKey(0)
    kx, kp = jax.random.split(key)

    N, C_IN, C_OUT, EXPANSION, LAYERS = 2, 8, 8, 2, 2
    params = make_params(kp, C_IN, C_OUT, EXPANSION, LAYERS)

    # (label, L, MXU operand dtype, tolerance): bf16 fast path on even L and
    # an exact-f32 path on odd L (exercises the stride-2 odd-length fix).
    checks = (("bf16", 16, jnp.bfloat16, 2e-1),
              ("f32", 17, jnp.float32, 5e-4))

    for label, L, mm_dtype, tol in checks:
        x_ncl = jax.random.normal(jax.random.fold_in(kx, L),
                                  (N, C_IN, L), jnp.float32)   # PyTorch NCL
        # layout: kernels run channels-last; transpose at the boundary.
        x_nlc = jnp.transpose(x_ncl, (0, 2, 1))
        out_nlc = jax.block_until_ready(
            mbconv_forward(x_nlc, params, matmul_dtype=mm_dtype))
        out_ncl = jnp.transpose(out_nlc, (0, 2, 1))

        ref_ncl = ref_mbconv(x_ncl, params)
        assert out_ncl.shape == ref_ncl.shape, (out_ncl.shape, ref_ncl.shape)
        err = float(jnp.max(jnp.abs(out_ncl - ref_ncl)))
        if err > tol:
            raise SystemExit(
                f"mismatch vs reference ({label}, L={L}): max abs err = {err}")

    print("KERNEL_OK")
</pallas_src>

<mosaic_0001>
module attributes {stable_mosaic.version = 11 : i64} {
  func.func @_mbconv_stack_kernel(%arg0: i32, %arg1: memref<1x16x8xf32, #tpu.memory_space<vmem>>, %arg2: memref<8x16xbf16, #tpu.memory_space<vmem>>, %arg3: memref<16x8xbf16, #tpu.memory_space<vmem>>, %arg4: memref<5x16xf32, #tpu.memory_space<vmem>>, %arg5: memref<1x8xf32, #tpu.memory_space<vmem>>, %arg6: memref<8x16xbf16, #tpu.memory_space<vmem>>, %arg7: memref<16x8xbf16, #tpu.memory_space<vmem>>, %arg8: memref<5x16xf32, #tpu.memory_space<vmem>>, %arg9: memref<1x8xf32, #tpu.memory_space<vmem>>, %arg10: memref<1x8x8xf32, #tpu.memory_space<vmem>>, %arg11: memref<18x16xf32, #tpu.memory_space<vmem>>) attributes {dimension_semantics = [#tpu.dimension_semantics<parallel>], iteration_bounds = array<i64: 2>, scalar_prefetch = 0 : i64, scratch_operands = 1 : i64, tpu.core_type = #tpu.core_type<tc>, window_params = [{transform_indices = @transform_0, window_bounds = array<i64: 1, 16, 8>}, {pipeline_mode = #tpu.pipeline_mode<synchronous>, transform_indices = @transform_1, window_bounds = array<i64: 8, 16>}, {pipeline_mode = #tpu.pipeline_mode<synchronous>, transform_indices = @transform_2, window_bounds = array<i64: 16, 8>}, {pipeline_mode = #tpu.pipeline_mode<synchronous>, transform_indices = @transform_3, window_bounds = array<i64: 5, 16>}, {pipeline_mode = #tpu.pipeline_mode<synchronous>, transform_indices = @transform_4, window_bounds = array<i64: 1, 8>}, {pipeline_mode = #tpu.pipeline_mode<synchronous>, transform_indices = @transform_5, window_bounds = array<i64: 8, 16>}, {pipeline_mode = #tpu.pipeline_mode<synchronous>, transform_indices = @transform_6, window_bounds = array<i64: 16, 8>}, {pipeline_mode = #tpu.pipeline_mode<synchronous>, transform_indices = @transform_7, window_bounds = array<i64: 5, 16>}, {pipeline_mode = #tpu.pipeline_mode<synchronous>, transform_indices = @transform_8, window_bounds = array<i64: 1, 8>}, {transform_indices = @transform_9, window_bounds = array<i64: 1, 8, 8>}]} {
    %cst = arith.constant 0.000000e+00 : f32
    %0 = vector.broadcast %cst : f32 to vector<1x16xf32>
    %c0 = arith.constant 0 : index
    %c0_0 = arith.constant 0 : index
    %1 = vector.load %arg11[%c0, %c0_0] : memref<18x16xf32, #tpu.memory_space<vmem>>, vector<1x16xf32>
    tpu.vector_store %arg11[%c0, %c0_0], %0 {strides = array<i32>} : memref<18x16xf32, #tpu.memory_space<vmem>>, vector<1x16xf32>,
    %c17 = arith.constant 17 : index
    %c0_1 = arith.constant 0 : index
    %2 = vector.load %arg11[%c17, %c0_1] : memref<18x16xf32, #tpu.memory_space<vmem>>, vector<1x16xf32>
    tpu.vector_store %arg11[%c17, %c0_1], %0 {strides = array<i32>} : memref<18x16xf32, #tpu.memory_space<vmem>>, vector<1x16xf32>,
    %c0_2 = arith.constant 0 : index
    %c0_3 = arith.constant 0 : index
    %c0_4 = arith.constant 0 : index
    %3 = vector.load %arg1[%c0_2, %c0_3, %c0_4] : memref<1x16x8xf32, #tpu.memory_space<vmem>>, vector<1x16x8xf32>
    %4 = vector.shape_cast %3 : vector<1x16x8xf32> to vector<16x8xf32>
    %c0_5 = arith.constant 0 : index
    %c0_6 = arith.constant 0 : index
    %5 = vector.load %arg4[%c0_5, %c0_6] : memref<5x16xf32, #tpu.memory_space<vmem>>, vector<5x16xf32>
    %6 = arith.truncf %4 : vector<16x8xf32> to vector<16x8xbf16>
    %c0_7 = arith.constant 0 : index
    %c0_8 = arith.constant 0 : index
    %7 = vector.load %arg2[%c0_7, %c0_8] : memref<8x16xbf16, #tpu.memory_space<vmem>>, vector<8x16xbf16>
    %cst_9 = arith.constant dense<0.000000e+00> : vector<16x16xf32>
    %8 = tpu.matmul %6, %7, %cst_9 {dimension_numbers = #tpu.dot_dimension_numbers<[1], [0], [0], [1], [0, 0, 1, 1], [], []>} : vector<16x8xbf16>, vector<8x16xbf16>, vector<16x16xf32> -> vector<16x16xf32>
    %9 = vector.extract_strided_slice %5 {offsets = [3, 0], sizes = [1, 16], strides = [1, 1]} : vector<5x16xf32> to vector<1x16xf32>
    %10 = vector.broadcast %9 : vector<1x16xf32> to vector<16x16xf32>
    %11 = arith.addf %8, %10 : vector<16x16xf32>
    %cst_10 = arith.constant 0.000000e+00 : f32
    %cst_11 = arith.constant 6.000000e+00 : f32
    %12 = vector.broadcast %cst_10 : f32 to vector<16x16xf32>
    %13 = arith.maximumf %12, %11 : vector<16x16xf32>
    %14 = vector.broadcast %cst_11 : f32 to vector<16x16xf32>
    %15 = arith.minimumf %14, %13 : vector<16x16xf32>
    %c1 = arith.constant 1 : index
    %c0_12 = arith.constant 0 : index
    %16 = vector.load %arg11[%c1, %c0_12] : memref<18x16xf32, #tpu.memory_space<vmem>>, vector<16x16xf32>
    tpu.vector_store %arg11[%c1, %c0_12], %15 {strides = array<i32>} : memref<18x16xf32, #tpu.memory_space<vmem>>, vector<16x16xf32>,
    %c0_13 = arith.constant 0 : index
    %c0_14 = arith.constant 0 : index
    %17 = vector.load %arg11[%c0_13, %c0_14] : memref<18x16xf32, #tpu.memory_space<vmem>>, vector<16x16xf32>
    %c2 = arith.constant 2 : index
    %c0_15 = arith.constant 0 : index
    %18 = vector.load %arg11[%c2, %c0_15] : memref<18x16xf32, #tpu.memory_space<vmem>>, vector<16x16xf32>
    %19 = vector.extract_strided_slice %5 {offsets = [0, 0], sizes = [1, 16], strides = [1, 1]} : vector<5x16xf32> to vector<1x16xf32>
    %20 = vector.broadcast %19 : vector<1x16xf32> to vector<16x16xf32>
    %21 = arith.mulf %17, %20 : vector<16x16xf32>
    %22 = vector.extract_strided_slice %5 {offsets = [1, 0], sizes = [1, 16], strides = [1, 1]} : vector<5x16xf32> to vector<1x16xf32>
    %23 = vector.broadcast %22 : vector<1x16xf32> to vector<16x16xf32>
    %24 = arith.mulf %15, %23 : vector<16x16xf32>
    %25 = arith.addf %21, %24 : vector<16x16xf32>
    %26 = vector.extract_strided_slice %5 {offsets = [2, 0], sizes = [1, 16], strides = [1, 1]} : vector<5x16xf32> to vector<1x16xf32>
    %27 = vector.broadcast %26 : vector<1x16xf32> to vector<16x16xf32>
    %28 = arith.mulf %18, %27 : vector<16x16xf32>
    %29 = arith.addf %25, %28 : vector<16x16xf32>
    %30 = vector.extract_strided_slice %5 {offsets = [4, 0], sizes = [1, 16], strides = [1, 1]} : vector<5x16xf32> to vector<1x16xf32>
    %31 = vector.broadcast %30 : vector<1x16xf32> to vector<16x16xf32>
    %32 = arith.addf %29, %31 : vector<16x16xf32>
    %cst_16 = arith.constant 0.000000e+00 : f32
    %cst_17 = arith.constant 6.000000e+00 : f32
    %33 = vector.broadcast %cst_16 : f32 to vector<16x16xf32>
    %34 = arith.maximumf %33, %32 : vector<16x16xf32>
    %35 = vector.broadcast %cst_17 : f32 to vector<16x16xf32>
    %36 = arith.minimumf %35, %34 : vector<16x16xf32>
    %37 = arith.truncf %36 : vector<16x16xf32> to vector<16x16xbf16>
    %c0_18 = arith.constant 0 : index
    %c0_19 = arith.constant 0 : index
    %38 = vector.load %arg3[%c0_18, %c0_19] : memref<16x8xbf16, #tpu.memory_space<vmem>>, vector<16x8xbf16>
    %cst_20 = arith.constant dense<0.000000e+00> : vector<16x8xf32>
    %39 = tpu.matmul %37, %38, %cst_20 {dimension_numbers = #tpu.dot_dimension_numbers<[1], [0], [0], [1], [0, 0, 1, 1], [], []>} : vector<16x16xbf16>, vector<16x8xbf16>, vector<16x8xf32> -> vector<16x8xf32>
    %c0_21 = arith.constant 0 : index
    %c0_22 = arith.constant 0 : index
    %40 = vector.load %arg5[%c0_21, %c0_22] : memref<1x8xf32, #tpu.memory_space<vmem>>, vector<1x8xf32>
    %41 = vector.broadcast %40 : vector<1x8xf32> to vector<16x8xf32>
    %42 = arith.addf %39, %41 : vector<16x8xf32>
    %43 = arith.addf %4, %42 : vector<16x8xf32>
    %c0_23 = arith.constant 0 : index
    %c0_24 = arith.constant 0 : index
    %44 = vector.load %arg8[%c0_23, %c0_24] : memref<5x16xf32, #tpu.memory_space<vmem>>, vector<5x16xf32>
    %45 = arith.truncf %43 : vector<16x8xf32> to vector<16x8xbf16>
    %c0_25 = arith.constant 0 : index
    %c0_26 = arith.constant 0 : index
    %46 = vector.load %arg6[%c0_25, %c0_26] : memref<8x16xbf16, #tpu.memory_space<vmem>>, vector<8x16xbf16>
    %cst_27 = arith.constant dense<0.000000e+00> : vector<16x16xf32>
    %47 = tpu.matmul %45, %46, %cst_27 {dimension_numbers = #tpu.dot_dimension_numbers<[1], [0], [0], [1], [0, 0, 1, 1], [], []>} : vector<16x8xbf16>, vector<8x16xbf16>, vector<16x16xf32> -> vector<16x16xf32>
    %48 = vector.extract_strided_slice %44 {offsets = [3, 0], sizes = [1, 16], strides = [1, 1]} : vector<5x16xf32> to vector<1x16xf32>
    %49 = vector.broadcast %48 : vector<1x16xf32> to vector<16x16xf32>
    %50 = arith.addf %47, %49 : vector<16x16xf32>
    %cst_28 = arith.constant 0.000000e+00 : f32
    %cst_29 = arith.constant 6.000000e+00 : f32
    %51 = vector.broadcast %cst_28 : f32 to vector<16x16xf32>
    %52 = arith.maximumf %51, %50 : vector<16x16xf32>
    %53 = vector.broadcast %cst_29 : f32 to vector<16x16xf32>
    %54 = arith.minimumf %53, %52 : vector<16x16xf32>
    %c1_30 = arith.constant 1 : index
    %c0_31 = arith.constant 0 : index
    %55 = vector.load %arg11[%c1_30, %c0_31] : memref<18x16xf32, #tpu.memory_space<vmem>>, vector<16x16xf32>
    tpu.vector_store %arg11[%c1_30, %c0_31], %54 {strides = array<i32>} : memref<18x16xf32, #tpu.memory_space<vmem>>, vector<16x16xf32>,
    %c0_32 = arith.constant 0 : index
    %c0_33 = arith.constant 0 : index
    %56 = tpu.strided_load %arg11[%c0_32, %c0_33] {strides = array<i32: 2, 1>} : memref<18x16xf32, #tpu.memory_space<vmem>>, vector<8x16xf32>
    %c1_34 = arith.constant 1 : index
    %c0_35 = arith.constant 0 : index
    %57 = tpu.strided_load %arg11[%c1_34, %c0_35] {strides = array<i32: 2, 1>} : memref<18x16xf32, #tpu.memory_space<vmem>>, vector<8x16xf32>
    %c2_36 = arith.constant 2 : index
    %c0_37 = arith.constant 0 : index
    %58 = tpu.strided_load %arg11[%c2_36, %c0_37] {strides = array<i32: 2, 1>} : memref<18x16xf32, #tpu.memory_space<vmem>>, vector<8x16xf32>
    %59 = vector.extract_strided_slice %44 {offsets = [0, 0], sizes = [1, 16], strides = [1, 1]} : vector<5x16xf32> to vector<1x16xf32>
    %60 = vector.broadcast %59 : vector<1x16xf32> to vector<8x16xf32>
    %61 = arith.mulf %56, %60 : vector<8x16xf32>
    %62 = vector.extract_strided_slice %44 {offsets = [1, 0], sizes = [1, 16], strides = [1, 1]} : vector<5x16xf32> to vector<1x16xf32>
    %63 = vector.broadcast %62 : vector<1x16xf32> to vector<8x16xf32>
    %64 = arith.mulf %57, %63 : vector<8x16xf32>
    %65 = arith.addf %61, %64 : vector<8x16xf32>
    %66 = vector.extract_strided_slice %44 {offsets = [2, 0], sizes = [1, 16], strides = [1, 1]} : vector<5x16xf32> to vector<1x16xf32>
    %67 = vector.broadcast %66 : vector<1x16xf32> to vector<8x16xf32>
    %68 = arith.mulf %58, %67 : vector<8x16xf32>
    %69 = arith.addf %65, %68 : vector<8x16xf32>
    %70 = vector.extract_strided_slice %44 {offsets = [4, 0], sizes = [1, 16], strides = [1, 1]} : vector<5x16xf32> to vector<1x16xf32>
    %71 = vector.broadcast %70 : vector<1x16xf32> to vector<8x16xf32>
    %72 = arith.addf %69, %71 : vector<8x16xf32>
    %cst_38 = arith.constant 0.000000e+00 : f32
    %cst_39 = arith.constant 6.000000e+00 : f32
    %73 = vector.broadcast %cst_38 : f32 to vector<8x16xf32>
    %74 = arith.maximumf %73, %72 : vector<8x16xf32>
    %75 = vector.broadcast %cst_39 : f32 to vector<8x16xf32>
    %76 = arith.minimumf %75, %74 : vector<8x16xf32>
    %77 = arith.truncf %76 : vector<8x16xf32> to vector<8x16xbf16>
    %c0_40 = arith.constant 0 : index
    %c0_41 = arith.constant 0 : index
    %78 = vector.load %arg7[%c0_40, %c0_41] : memref<16x8xbf16, #tpu.memory_space<vmem>>, vector<16x8xbf16>
    %cst_42 = arith.constant dense<0.000000e+00> : vector<8x8xf32>
    %79 = tpu.matmul %77, %78, %cst_42 {dimension_numbers = #tpu.dot_dimension_numbers<[1], [0], [0], [1], [0, 0, 1, 1], [], []>} : vector<8x16xbf16>, vector<16x8xbf16>, vector<8x8xf32> -> vector<8x8xf32>
    %c0_43 = arith.constant 0 : index
    %c0_44 = arith.constant 0 : index
    %80 = vector.load %arg9[%c0_43, %c0_44] : memref<1x8xf32, #tpu.memory_space<vmem>>, vector<1x8xf32>
    %81 = vector.broadcast %80 : vector<1x8xf32> to vector<8x8xf32>
    %82 = arith.addf %79, %81 : vector<8x8xf32>
    %c0_45 = arith.constant 0 : index
    %c0_46 = arith.constant 0 : index
    %c0_47 = arith.constant 0 : index
    %83 = vector.load %arg10[%c0_45, %c0_46, %c0_47] : memref<1x8x8xf32, #tpu.memory_space<vmem>>, vector<1x8x8xf32>
    %84 = vector.shape_cast %83 : vector<1x8x8xf32> to vector<8x8xf32>
    %85 = vector.shape_cast %82 : vector<8x8xf32> to vector<1x8x8xf32>
    tpu.vector_store %arg10[%c0_45, %c0_46, %c0_47], %85 {strides = array<i32>} : memref<1x8x8xf32, #tpu.memory_space<vmem>>, vector<1x8x8xf32>,
    return
  }
  func.func @transform_0(%arg0: i32) -> (i32, i32, i32) {
    %c0_i32 = arith.constant 0 : i32
    %c0_i32_0 = arith.constant 0 : i32
    %c0_i32_1 = arith.constant 0 : i32
    return %arg0, %c0_i32, %c0_i32_0 : i32, i32, i32
  }
  func.func @transform_1(%arg0: i32) -> (i32, i32) {
    %c0_i32 = arith.constant 0 : i32
    %c0_i32_0 = arith.constant 0 : i32
    %c0_i32_1 = arith.constant 0 : i32
    return %c0_i32, %c0_i32_0 : i32, i32
  }
  func.func @transform_2(%arg0: i32) -> (i32, i32) {
    %c0_i32 = arith.constant 0 : i32
    %c0_i32_0 = arith.constant 0 : i32
    %c0_i32_1 = arith.constant 0 : i32
    return %c0_i32, %c0_i32_0 : i32, i32
  }
  func.func @transform_3(%arg0: i32) -> (i32, i32) {
    %c0_i32 = arith.constant 0 : i32
    %c0_i32_0 = arith.constant 0 : i32
    %c0_i32_1 = arith.constant 0 : i32
    return %c0_i32, %c0_i32_0 : i32, i32
  }
  func.func @transform_4(%arg0: i32) -> (i32, i32) {
    %c0_i32 = arith.constant 0 : i32
    %c0_i32_0 = arith.constant 0 : i32
    %c0_i32_1 = arith.constant 0 : i32
    return %c0_i32, %c0_i32_0 : i32, i32
  }
  func.func @transform_5(%arg0: i32) -> (i32, i32) {
    %c0_i32 = arith.constant 0 : i32
    %c0_i32_0 = arith.constant 0 : i32
    %c0_i32_1 = arith.constant 0 : i32
    return %c0_i32, %c0_i32_0 : i32, i32
  }
  func.func @transform_6(%arg0: i32) -> (i32, i32) {
    %c0_i32 = arith.constant 0 : i32
    %c0_i32_0 = arith.constant 0 : i32
    %c0_i32_1 = arith.constant 0 : i32
    return %c0_i32, %c0_i32_0 : i32, i32
  }
  func.func @transform_7(%arg0: i32) -> (i32, i32) {
    %c0_i32 = arith.constant 0 : i32
    %c0_i32_0 = arith.constant 0 : i32
    %c0_i32_1 = arith.constant 0 : i32
    return %c0_i32, %c0_i32_0 : i32, i32
  }
  func.func @transform_8(%arg0: i32) -> (i32, i32) {
    %c0_i32 = arith.constant 0 : i32
    %c0_i32_0 = arith.constant 0 : i32
    %c0_i32_1 = arith.constant 0 : i32
    return %c0_i32, %c0_i32_0 : i32, i32
  }
  func.func @transform_9(%arg0: i32) -> (i32, i32, i32) {
    %c0_i32 = arith.constant 0 : i32
    %c0_i32_0 = arith.constant 0 : i32
    %c0_i32_1 = arith.constant 0 : i32
    return %arg0, %c0_i32, %c0_i32_0 : i32, i32, i32
  }
}

</mosaic_0001>

<llo_original>
// kernel: tpu_custom_call.1
$region0: #{tpu_custom_call.1}
  #allocation0 [shape = 'u32[]', space=smem, size = 0x4, offset = 0x4, fixed_abs, tag = 'smem constant byte address 0x4 - core index']
  #allocation1 [shape = 'u32[144,128]{1,0:T(1,128)}', space=vmem, size = 0x12000, scoped, tag = 'internal scratch']
  #allocation2 [shape = 'f32[18,16]{1,0:T(8,128)}', space=vmem, size = 0x3000, scoped, tag = 'scratch operand']
  %s0 = inlined_call_operand.vmem [shape: f32[2,16,8], index: 0, kind: input, shape index: {}]
  %s1 = inlined_call_operand.vmem [shape: bf16[8,16], index: 1, kind: input, shape index: {}]
  %s2 = inlined_call_operand.vmem [shape: bf16[16,8], index: 2, kind: input, shape index: {}]
  %s3 = inlined_call_operand.vmem [shape: f32[5,16], index: 3, kind: input, shape index: {}]
  %s4 = inlined_call_operand.vmem [shape: f32[1,8], index: 4, kind: input, shape index: {}]
  %s5 = inlined_call_operand.vmem [shape: bf16[8,16], index: 5, kind: input, shape index: {}]
  %s6 = inlined_call_operand.vmem [shape: bf16[16,8], index: 6, kind: input, shape index: {}]
  %s7 = inlined_call_operand.vmem [shape: f32[5,16], index: 7, kind: input, shape index: {}]
  %s8 = inlined_call_operand.vmem [shape: f32[1,8], index: 8, kind: input, shape index: {}]
  %s9 = inlined_call_operand.hbm [shape: f32[2,8,8], index: 9, kind: output, shape index: {}]
  %s10 = sld [smem:[#allocation0]]
  $region69: #{tpu_custom_call.1} parent=0
    _
  %s12 = ssub.s32 1, %s10
  %s13 = scalar_select 0, %s12, %s10
  $region1: #{tpu_custom_call.1} parent=0
    #allocation3 [shape = 'u8[8192]{0}', space=vmem, size = 0x2000, scoped, tag = 'output window, operand 0']
    #allocation4 [shape = 's32[2]{0}', space=sflag, size = 0x8, scoped, tag = 'scoped memory for tpu_custom_call.1']
    %14 = vsyncpa [#allocation4], 0
    %s15 = scalar_lea.sflag [#allocation4], 1
    %16 = vsyncpa %s15, 0
    loop: start=0, step=1, limit=4
    $region2: #{tpu_custom_call.1} parent=1 // loop_pre_header
      _
    $region3: #{tpu_custom_call.1} parent=1 // loop_header
      %s18 = sphi 0, %s22
      %p19 = scmp.ge.s32.totalorder %s18, 4
      %s28 = sphi 0, %s30
      %s31 = sphi 0, %s28
      %s32 = sphi 0, %s31
      %s48 = sphi 0, %s32
      %s52 = sphi 0, %s52
      %s54 = sphi 0, %s52
      %s55 = sphi 0, %s54
      %s69 = sphi 0, %s55
      %s73 = sphi 0, %s73
      %s75 = sphi 0, %s73
      %s76 = sphi 0, %s75
      %s90 = sphi 0, %s76
      %s94 = sphi 0, %s94
      %s96 = sphi 0, %s94
      %s97 = sphi 0, %s96
      %s111 = sphi 0, %s97
      %s115 = sphi 0, %s115
      %s117 = sphi 0, %s115
      %s118 = sphi 0, %s117
      %s132 = sphi 0, %s118
      %s136 = sphi 0, %s136
      %s138 = sphi 0, %s136
      %s139 = sphi 0, %s138
      %s153 = sphi 0, %s139
      %s157 = sphi 0, %s157
      %s159 = sphi 0, %s157
      %s160 = sphi 0, %s159
      %s174 = sphi 0, %s160
      %s178 = sphi 0, %s178
      %s180 = sphi 0, %s178
      %s181 = sphi 0, %s180
      %s195 = sphi 0, %s181
      %s199 = sphi 0, %s199
      %s201 = sphi 0, %s199
      %s202 = sphi 0, %s201
      %s216 = sphi 0, %s202
      %s222 = sphi 0, %s224
      %s225 = sphi 0, %s222
      %s226 = sphi 0, %s225
      %s242 = sphi 0, %s226
    $region4: #{tpu_custom_call.1} parent=1 // loop_header_branch
      %21 = sbr.rel (%p19) target = $region8
    $region5: #{tpu_custom_call.1} parent=1 // loop_body
      %s23 = ssub.s32 %s18, 1
      %s24 = ssub.s32 %s18, 2
      %s25 = sadd.s32 %s18, 1
      %s26 = ssub.s32 %s18, %s25
      %p27 = scmp.eq.s32.totalorder %s26, 0
      %s29 = sadd.s32 %s28, 1
      %s30 = scalar_select %p27, %s28, %s29
      %p33 = pneg %p27
      %p34 = scmp.eq.s32.totalorder %s18, 1
      %p35 = por %p33, %p34
      %p36 = scmp.ne.s32.totalorder %s28, %s31
      %p37 = scmp.eq.s32.totalorder %s18, 0
      %p38 = por %p36, %p37
      %p39 = scmp.ne.s32.totalorder %s28, %s31
      %p40 = scmp.eq.s32.totalorder %s23, 1
      %p41 = por %p39, %p40
      %p42 = scmp.ne.s32.totalorder %s31, %s32
      %p43 = scmp.eq.s32.totalorder %s23, 0
      %p44 = por %p42, %p43
      %p45 = scmp.ne.s32.totalorder %s31, %s32
      %p46 = scmp.eq.s32.totalorder %s24, 1
      %p47 = por %p45, %p46
      %p49 = scmp.ne.s32.totalorder %s32, %s48
      %p50 = scmp.eq.s32.totalorder %s24, 0
      %p51 = por %p49, %p50
      %s53 = sadd.s32 %s52, 1
      %p56 = scmp.eq.s32.totalorder %s18, 1
      %p57 = scmp.ne.s32.totalorder %s52, %s54
      %p58 = scmp.eq.s32.totalorder %s18, 0
      %p59 = por %p57, %p58
      %p60 = scmp.ne.s32.totalorder %s52, %s54
      %p61 = scmp.eq.s32.totalorder %s23, 1
      %p62 = por %p60, %p61
      %p63 = scmp.ne.s32.totalorder %s54, %s55
      %p64 = scmp.eq.s32.totalorder %s23, 0
      %p65 = por %p63, %p64
      %p66 = scmp.ne.s32.totalorder %s54, %s55
      %p67 = scmp.eq.s32.totalorder %s24, 1
      %p68 = por %p66, %p67
      %p70 = scmp.ne.s32.totalorder %s55, %s69
      %p71 = scmp.eq.s32.totalorder %s24, 0
      %p72 = por %p70, %p71
      %s74 = sadd.s32 %s73, 1
      %p77 = scmp.eq.s32.totalorder %s18, 1
      %p78 = scmp.ne.s32.totalorder %s73, %s75
      %p79 = scmp.eq.s32.totalorder %s18, 0
      %p80 = por %p78, %p79
      %p81 = scmp.ne.s32.totalorder %s73, %s75
      %p82 = scmp.eq.s32.totalorder %s23, 1
      %p83 = por %p81, %p82
      %p84 = scmp.ne.s32.totalorder %s75, %s76
      %p85 = scmp.eq.s32.totalorder %s23, 0
      %p86 = por %p84, %p85
      %p87 = scmp.ne.s32.totalorder %s75, %s76
      %p88 = scmp.eq.s32.totalorder %s24, 1
      %p89 = por %p87, %p88
      %p91 = scmp.ne.s32.totalorder %s76, %s90
      %p92 = scmp.eq.s32.totalorder %s24, 0
      %p93 = por %p91, %p92
      %s95 = sadd.s32 %s94, 1
      %p98 = scmp.eq.s32.totalorder %s18, 1
      %p99 = scmp.ne.s32.totalorder %s94, %s96
      %p100 = scmp.eq.s32.totalorder %s18, 0
      %p101 = por %p99, %p100
      %p102 = scmp.ne.s32.totalorder %s94, %s96
      %p103 = scmp.eq.s32.totalorder %s23, 1
      %p104 = por %p102, %p103
      %p105 = scmp.ne.s32.totalorder %s96, %s97
      %p106 = scmp.eq.s32.totalorder %s23, 0
      %p107 = por %p105, %p106
      %p108 = scmp.ne.s32.totalorder %s96, %s97
      %p109 = scmp.eq.s32.totalorder %s24, 1
      %p110 = por %p108, %p109
      %p112 = scmp.ne.s32.totalorder %s97, %s111
      %p113 = scmp.eq.s32.totalorder %s24, 0
      %p114 = por %p112, %p113
      %s116 = sadd.s32 %s115, 1
      %p119 = scmp.eq.s32.totalorder %s18, 1
      %p120 = scmp.ne.s32.totalorder %s115, %s117
      %p121 = scmp.eq.s32.totalorder %s18, 0
      %p122 = por %p120, %p121
      %p123 = scmp.ne.s32.totalorder %s115, %s117
      %p124 = scmp.eq.s32.totalorder %s23, 1
      %p125 = por %p123, %p124
      %p126 = scmp.ne.s32.totalorder %s117, %s118
      %p127 = scmp.eq.s32.totalorder %s23, 0
      %p128 = por %p126, %p127
      %p129 = scmp.ne.s32.totalorder %s117, %s118
      %p130 = scmp.eq.s32.totalorder %s24, 1
      %p131 = por %p129, %p130
      %p133 = scmp.ne.s32.totalorder %s118, %s132
      %p134 = scmp.eq.s32.totalorder %s24, 0
      %p135 = por %p133, %p134
      %s137 = sadd.s32 %s136, 1
      %p140 = scmp.eq.s32.totalorder %s18, 1
      %p141 = scmp.ne.s32.totalorder %s136, %s138
      %p142 = scmp.eq.s32.totalorder %s18, 0
      %p143 = por %p141, %p142
      %p144 = scmp.ne.s32.totalorder %s136, %s138
      %p145 = scmp.eq.s32.totalorder %s23, 1
      %p146 = por %p144, %p145
      %p147 = scmp.ne.s32.totalorder %s138, %s139
      %p148 = scmp.eq.s32.totalorder %s23, 0
      %p149 = por %p147, %p148
      %p150 = scmp.ne.s32.totalorder %s138, %s139
      %p151 = scmp.eq.s32.totalorder %s24, 1
      %p152 = por %p150, %p151
      %p154 = scmp.ne.s32.totalorder %s139, %s153
      %p155 = scmp.eq.s32.totalorder %s24, 0
      %p156 = por %p154, %p155
      %s158 = sadd.s32 %s157, 1
      %p161 = scmp.eq.s32.totalorder %s18, 1
      %p162 = scmp.ne.s32.totalorder %s157, %s159
      %p163 = scmp.eq.s32.totalorder %s18, 0
      %p164 = por %p162, %p163
      %p165 = scmp.ne.s32.totalorder %s157, %s159
      %p166 = scmp.eq.s32.totalorder %s23, 1
      %p167 = por %p165, %p166
      %p168 = scmp.ne.s32.totalorder %s159, %s160
      %p169 = scmp.eq.s32.totalorder %s23, 0
      %p170 = por %p168, %p169
      %p171 = scmp.ne.s32.totalorder %s159, %s160
      %p172 = scmp.eq.s32.totalorder %s24, 1
      %p173 = por %p171, %p172
      %p175 = scmp.ne.s32.totalorder %s160, %s174
      %p176 = scmp.eq.s32.totalorder %s24, 0
      %p177 = por %p175, %p176
      %s179 = sadd.s32 %s178, 1
      %p182 = scmp.eq.s32.totalorder %s18, 1
      %p183 = scmp.ne.s32.totalorder %s178, %s180
      %p184 = scmp.eq.s32.totalorder %s18, 0
      %p185 = por %p183, %p184
      %p186 = scmp.ne.s32.totalorder %s178, %s180
      %p187 = scmp.eq.s32.totalorder %s23, 1
      %p188 = por %p186, %p187
      %p189 = scmp.ne.s32.totalorder %s180, %s181
      %p190 = scmp.eq.s32.totalorder %s23, 0
      %p191 = por %p189, %p190
      %p192 = scmp.ne.s32.totalorder %s180, %s181
      %p193 = scmp.eq.s32.totalorder %s24, 1
      %p194 = por %p192, %p193
      %p196 = scmp.ne.s32.totalorder %s181, %s195
      %p197 = scmp.eq.s32.totalorder %s24, 0
      %p198 = por %p196, %p197
      %s200 = sadd.s32 %s199, 1
      %p203 = scmp.eq.s32.totalorder %s18, 1
      %p204 = scmp.ne.s32.totalorder %s199, %s201
      %p205 = scmp.eq.s32.totalorder %s18, 0
      %p206 = por %p204, %p205
      %p207 = scmp.ne.s32.totalorder %s199, %s201
      %p208 = scmp.eq.s32.totalorder %s23, 1
      %p209 = por %p207, %p208
      %p210 = scmp.ne.s32.totalorder %s201, %s202
      %p211 = scmp.eq.s32.totalorder %s23, 0
      %p212 = por %p210, %p211
      %p213 = scmp.ne.s32.totalorder %s201, %s202
      %p214 = scmp.eq.s32.totalorder %s24, 1
      %p215 = por %p213, %p214
      %p217 = scmp.ne.s32.totalorder %s202, %s216
      %p218 = scmp.eq.s32.totalorder %s24, 0
      %p219 = por %p217, %p218
      %s220 = ssub.s32 %s18, %s25
      %p221 = scmp.eq.s32.totalorder %s220, 0
      %s223 = sadd.s32 %s222, 1
      %s224 = scalar_select %p221, %s222, %s223
      %p227 = pneg %p221
      %p228 = scmp.eq.s32.totalorder %s18, 1
      %p229 = por %p227, %p228
      %p230 = scmp.ne.s32.totalorder %s222, %s225
      %p231 = scmp.eq.s32.totalorder %s18, 0
      %p232 = por %p230, %p231
      %p233 = scmp.ne.s32.totalorder %s222, %s225
      %p234 = scmp.eq.s32.totalorder %s23, 1
      %p235 = por %p233, %p234
      %p236 = scmp.ne.s32.totalorder %s225, %s226
      %p237 = scmp.eq.s32.totalorder %s23, 0
      %p238 = por %p236, %p237
      %p239 = scmp.ne.s32.totalorder %s225, %s226
      %p240 = scmp.eq.s32.totalorder %s24, 1
      %p241 = por %p239, %p240
      %p243 = scmp.ne.s32.totalorder %s226, %s242
      %p244 = scmp.eq.s32.totalorder %s24, 0
      %p245 = por %p243, %p244
      %p246 = scmp.le.s32.totalorder 1, %s18
      %p247 = scmp.lt.s32.totalorder %s18, 3
      %p248 = pnand %p246, %p247
      %p249 = pneg %p248
      // Predicated region
      $region9: #{tpu_custom_call.1} parent=5 // pred_check
        _
      $region10: #{tpu_custom_call.1} parent=5 // pred_check_branch
        %251 = sbr.rel (%p248) target = $region12
      $region11: #{tpu_custom_call.1} parent=5 // pred_region
        %s252 = ssub.s32 %s18, 1
        // Predicated region
        $region13: #{tpu_custom_call.1} parent=11 // pred_check
          %p253 = pneg %p65
        $region14: #{tpu_custom_call.1} parent=11 // pred_check_branch
          %255 = sbr.rel (%p253) target = $region16
        $region15: #{tpu_custom_call.1} parent=11 // pred_region
          _
        $region16: #{tpu_custom_call.1} parent=11 // pred_fallthru
          _
        // Predicated region
        $region17: #{tpu_custom_call.1} parent=11 // pred_check
          %p256 = pneg %p86
        $region18: #{tpu_custom_call.1} parent=11 // pred_check_branch
          %258 = sbr.rel (%p256) target = $region20
        $region19: #{tpu_custom_call.1} parent=11 // pred_region
          _
        $region20: #{tpu_custom_call.1} parent=11 // pred_fallthru
          _
        // Predicated region
        $region21: #{tpu_custom_call.1} parent=11 // pred_check
          %p259 = pneg %p107
        $region22: #{tpu_custom_call.1} parent=11 // pred_check_branch
          %261 = sbr.rel (%p259) target = $region24
        $region23: #{tpu_custom_call.1} parent=11 // pred_region
          _
        $region24: #{tpu_custom_call.1} parent=11 // pred_fallthru
          _
        // Predicated region
        $region25: #{tpu_custom_call.1} parent=11 // pred_check
          %p262 = pneg %p128
        $region26: #{tpu_custom_call.1} parent=11 // pred_check_branch
          %264 = sbr.rel (%p262) target = $region28
        $region27: #{tpu_custom_call.1} parent=11 // pred_region
          _
        $region28: #{tpu_custom_call.1} parent=11 // pred_fallthru
          _
        // Predicated region
        $region29: #{tpu_custom_call.1} parent=11 // pred_check
          %p265 = pneg %p149
        $region30: #{tpu_custom_call.1} parent=11 // pred_check_branch
          %267 = sbr.rel (%p265) target = $region32
        $region31: #{tpu_custom_call.1} parent=11 // pred_region
          _
        $region32: #{tpu_custom_call.1} parent=11 // pred_fallthru
          _
        // Predicated region
        $region33: #{tpu_custom_call.1} parent=11 // pred_check
          %p268 = pneg %p170
        $region34: #{tpu_custom_call.1} parent=11 // pred_check_branch
          %270 = sbr.rel (%p268) target = $region36
        $region35: #{tpu_custom_call.1} parent=11 // pred_region
          _
        $region36: #{tpu_custom_call.1} parent=11 // pred_fallthru
          _
        // Predicated region
        $region37: #{tpu_custom_call.1} parent=11 // pred_check
          %p271 = pneg %p191
        $region38: #{tpu_custom_call.1} parent=11 // pred_check_branch
          %273 = sbr.rel (%p271) target = $region40
        $region39: #{tpu_custom_call.1} parent=11 // pred_region
          _
        $region40: #{tpu_custom_call.1} parent=11 // pred_fallthru
          _
        // Predicated region
        $region41: #{tpu_custom_call.1} parent=11 // pred_check
          %p274 = pneg %p212
        $region42: #{tpu_custom_call.1} parent=11 // pred_check_branch
          %276 = sbr.rel (%p274) target = $region44
        $region43: #{tpu_custom_call.1} parent=11 // pred_region
          _
        $region44: #{tpu_custom_call.1} parent=11 // pred_fallthru
          _
      $region12: #{tpu_custom_call.1} parent=5 // pred_fallthru
        _
      %p277 = scmp.lt.s32.totalorder %s18, 2
      // Predicated region
      $region45: #{tpu_custom_call.1} parent=5 // pred_check
        %p278 = pneg %p277
      $region46: #{tpu_custom_call.1} parent=5 // pred_check_branch
        %280 = sbr.rel (%p278) target = $region48
      $region47: #{tpu_custom_call.1} parent=5 // pred_region
        // Predicated region
        $region49: #{tpu_custom_call.1} parent=47 // pred_check
          %p281 = pneg %p38
        $region50: #{tpu_custom_call.1} parent=47 // pred_check_branch
          %283 = sbr.rel (%p281) target = $region52
        $region51: #{tpu_custom_call.1} parent=47 // pred_region
          %p284 = scmp.lt.s32.totalorder %s18, 1
          %s285 = scalar_select %p284, %s18, 1
          %s286 = smul.addr %s285, 2
          %s287 = smul.addr %s286, 8
          %s288 = scalar_lea.vmem %s0, %s287
        $region52: #{tpu_custom_call.1} parent=47 // pred_fallthru
          _
      $region48: #{tpu_custom_call.1} parent=5 // pred_fallthru
        _
      %p289 = scmp.le.s32.totalorder 1, %s18
      %p290 = scmp.lt.s32.totalorder %s18, 3
      %p291 = pnand %p289, %p290
      %p292 = pneg %p291
      // Predicated region
      $region53: #{tpu_custom_call.1} parent=5 // pred_check
        _
      $region54: #{tpu_custom_call.1} parent=5 // pred_check_branch
        %294 = sbr.rel (%p291) target = $region56
      $region55: #{tpu_custom_call.1} parent=5 // pred_region
        %s295 = ssub.s32 %s18, 1
        %p296 = scmp.lt.s32.totalorder %s23, 1
        %s297 = scalar_select %p296, %s23, 1
        %s298 = smul.addr %s297, 2
        %s299 = smul.addr %s298, 8
        %s300 = scalar_lea.vmem %s0, %s299
        %p301 = pneg %p44
        %p302 = pneg %p41
        %p303 = pneg %p65
        %p304 = pneg %p62
        %p305 = pneg %p86
        %p306 = pneg %p83
        %p307 = pneg %p107
        %p308 = pneg %p104
        %p309 = pneg %p128
        %p310 = pneg %p125
        %p311 = pneg %p149
        %p312 = pneg %p146
        %p313 = pneg %p170
        %p314 = pneg %p167
        %p315 = pneg %p191
        %p316 = pneg %p188
        %p317 = pneg %p212
        %p318 = pneg %p209
        %p319 = pneg %p238
        %p320 = pneg %p235
        %s321 = sand.u32 %s225, 1
        %s322 = scalar_lea.sflag [#allocation4], %s321
        %s323 = sand.u32 %s225, 1
        %s324 = smul.addr %s323, 8
        %s325 = scalar_lea.vmem [#allocation3], %s324
        %p326 = scmp.lt.s32.totalorder %s23, 1
        %s327 = scalar_select %p326, %s23, 1
        %s328 = smul.addr %s327, 2
        %s329 = smul.addr %s328, 8
        %s330 = scalar_lea.vmem %s0, %s329
        %vm332 = vcmask 122880
        %333 = vst.msk [vmem:[#allocation2] sm:$0x1] %vm332, 0.0
        %334 = vst.msk [vmem:[#allocation2 + $0x11] sm:$0x1] %vm332, 0.0
        %v335 = vld [vmem:[%s330] sm:$0xff]
        %v336 = vld [vmem:[%s330 + $0x8] sm:$0xff]
        %v337 = vld [vmem:[%s3] sm:$0x1f]
        %v338 = vpack.c.bf16 %v336, %v335
        %v339 = vld [vmem:[%s1] sm:$0xf]
        %v340 = vlaneseq
        %v341 = vshrl.u32 %v340, 7
        %v342 = vsub.s32 3, %v341
        %v343 = vrot.slane %v337, %v342
        %vm344 = vcmask 64512
        %v346 = vsel %vm344, %v338, 0
        %vm348 = vcmask 1043456
        %v350 = vsel %vm348, %v339, 0
        %352 = vmatprep.subr.bf16.mxu0 0
        %353 = vmatpush1.bf16.msra.mxu0 %v350
        %354 = vmatprep.subr.bf16.mxu0 0
        %355 = vmatpush1.bf16.msra.mxu0 0
        %356 = vmatprep.subr.bf16.mxu0 0
        %357 = vmatpush1.bf16.msra.mxu0 0
        %358 = vmatprep.subr.bf16.mxu0 0
        %359 = vmatpush1.bf16.msra.mxu0 0
        %360 = vmatprep.subr.bf16.mxu0 0
        %361 = vmatpush1.bf16.msra.mxu0 0
        %362 = vmatprep.subr.bf16.mxu0 0
        %363 = vmatpush1.bf16.msra.mxu0 0
        %364 = vmatprep.subr.bf16.mxu0 0
        %365 = vmatpush1.bf16.msra.mxu0 0
        %366 = vmatprep.subr.bf16.mxu0 0
        %367 = vmatpush1.bf16.msra.mxu0 0
        %368 = vmatprep.subr.bf16.mxu0 0
        %369 = vmatpush1.bf16.msra.mxu0 0
        %370 = vmatprep.subr.bf16.mxu0 0
        %371 = vmatpush1.bf16.msra.mxu0 0
        %372 = vmatprep.subr.bf16.mxu0 0
        %373 = vmatpush1.bf16.msra.mxu0 0
        %374 = vmatprep.subr.bf16.mxu0 0
        %375 = vmatpush1.bf16.msra.mxu0 0
        %376 = vmatprep.subr.bf16.mxu0 0
        %377 = vmatpush1.bf16.msra.mxu0 0
        %378 = vmatprep.subr.bf16.mxu0 0
        %379 = vmatpush1.bf16.msra.mxu0 0
        %380 = vmatprep.subr.bf16.mxu0 0
        %381 = vmatpush1.bf16.msra.mxu0 0
        %382 = vmatprep.subr.bf16.mxu0 0
        %383 = vmatpush1.bf16.msra.mxu0 0
        %384 = vmatprep.mubr.bf16.mxu0 0
        %385 = vmatmul.mubr.bf16.gmra.mrb[0].mxu0 %v346
        %v386 = vpop.f32.mrb[0].mxu0
        %v387 = vadd.f32 %v343, %v386
        %v388 = vpop.f32.mrb[0].mxu0
        %v389 = vpop.f32.mrb[0].mxu0
        %v390 = vadd.f32 %v343, %v389
        %v391 = vpop.f32.mrb[0].mxu0
        %392 = vdwg.mxu0
        %v393 = vmax.f32 %v387, 0.0
        %v394 = vmax.f32 %v390, 0.0
        %v395 = vmin.f32 %v393, 6.0
        %v396 = vmin.f32 %v394, 6.0
        %vm397 = vcmask 130048
        %398 = vst.msk [vmem:[#allocation2 + $0x1] sm:$0xff] %vm397, %v395
        %399 = vst.msk [vmem:[#allocation2 + $0x9] sm:$0xff] %vm397, %v396
        %v400 = vld [vmem:[#allocation2] sm:$0xff]
        %v401 = vld [vmem:[#allocation2 + $0x8] sm:$0xff]
        %v402 = vld [vmem:[#allocation2 + $0x2] sm:$0xff]
        %v403 = vld [vmem:[#allocation2 + $0xa] sm:$0xff]
        %v404 = vlaneseq
        %v405 = vshrl.u32 %v404, 7
        %v406 = vsub.s32 0, %v405
        %v407 = vrot.slane %v337, %v406
        %v408 = vmul.f32 %v400, %v407
        %v409 = vmul.f32 %v401, %v407
        %v410 = vlaneseq
        %v411 = vshrl.u32 %v410, 7
        %v412 = vsub.s32 1, %v411
        %v413 = vrot.slane %v337, %v412
        %v414 = vmul.f32 %v395, %v413
        %v415 = vmul.f32 %v396, %v413
        %v416 = vadd.f32 %v408, %v414
        %v417 = vadd.f32 %v409, %v415
        %v418 = vlaneseq
        %v419 = vshrl.u32 %v418, 7
        %v420 = vsub.s32 2, %v419
        %v421 = vrot.slane %v337, %v420
        %v422 = vmul.f32 %v402, %v421
        %v423 = vmul.f32 %v403, %v421
        %v424 = vadd.f32 %v416, %v422
        %v425 = vadd.f32 %v417, %v423
        %v426 = vlaneseq
        %v427 = vshrl.u32 %v426, 7
        %v428 = vsub.s32 4, %v427
        %v429 = vrot.slane %v337, %v428
        %v430 = vadd.f32 %v424, %v429
        %v431 = vadd.f32 %v425, %v429
        %v432 = vmax.f32 %v430, 0.0
        %v433 = vmax.f32 %v431, 0.0
        %v434 = vmin.f32 %v432, 6.0
        %v435 = vmin.f32 %v433, 6.0
        %v436 = vpack.c.bf16 %v435, %v434
        %v437 = vld [vmem:[%s2] sm:$0xf]
        %v438 = vld [vmem:[%s2 + $0x4] sm:$0xf]
        %v439 = vld [vmem:[%s4] sm:$0x1]
        %v441 = vlaneseq
        %v442 = vshrl.u32 %v441, 7
        %v443 = vsub.s32 0, %v442
        %v444 = vrot.slane %v439, %v443
        %v448 = vunpack.c.l.b16 %v437
        %v449 = vunpack.c.l.b16 %v438
        %v450 = vpack.c.b16 %v449, %v448
        %v453 = vsel %vm397, %v436, 0
        %455 = vmatprep.subr.bf16.mxu0 0
        %456 = vmatpush1.bf16.msra.mxu0 %v450
        %457 = vmatprep.subr.bf16.mxu0 0
        %458 = vmatpush1.bf16.msra.mxu0 0
        %459 = vmatprep.subr.bf16.mxu0 0
        %460 = vmatpush1.bf16.msra.mxu0 0
        %461 = vmatprep.subr.bf16.mxu0 0
        %462 = vmatpush1.bf16.msra.mxu0 0
        %463 = vmatprep.subr.bf16.mxu0 0
        %464 = vmatpush1.bf16.msra.mxu0 0
        %465 = vmatprep.subr.bf16.mxu0 0
        %466 = vmatpush1.bf16.msra.mxu0 0
        %467 = vmatprep.subr.bf16.mxu0 0
        %468 = vmatpush1.bf16.msra.mxu0 0
        %469 = vmatprep.subr.bf16.mxu0 0
        %470 = vmatpush1.bf16.msra.mxu0 0
        %471 = vmatprep.subr.bf16.mxu0 0
        %472 = vmatpush1.bf16.msra.mxu0 0
        %473 = vmatprep.subr.bf16.mxu0 0
        %474 = vmatpush1.bf16.msra.mxu0 0
        %475 = vmatprep.subr.bf16.mxu0 0
        %476 = vmatpush1.bf16.msra.mxu0 0
        %477 = vmatprep.subr.bf16.mxu0 0
        %478 = vmatpush1.bf16.msra.mxu0 0
        %479 = vmatprep.subr.bf16.mxu0 0
        %480 = vmatpush1.bf16.msra.mxu0 0
        %481 = vmatprep.subr.bf16.mxu0 0
        %482 = vmatpush1.bf16.msra.mxu0 0
        %483 = vmatprep.subr.bf16.mxu0 0
        %484 = vmatpush1.bf16.msra.mxu0 0
        %485 = vmatprep.subr.bf16.mxu0 0
        %486 = vmatpush1.bf16.msra.mxu0 0
        %487 = vmatprep.mubr.bf16.mxu0 0
        %488 = vmatmul.mubr.bf16.gmra.mrb[0].mxu0 %v453
        %v489 = vpop.f32.mrb[0].mxu0
        %v490 = vadd.f32 %v444, %v489
        %v491 = vpop.f32.mrb[0].mxu0
        %v492 = vpop.f32.mrb[0].mxu0
        %v493 = vadd.f32 %v444, %v492
        %v494 = vpop.f32.mrb[0].mxu0
        %495 = vdwg.mxu0
        %v496 = vadd.f32 %v335, %v490
        %v497 = vadd.f32 %v336, %v493
        %v498 = vld [vmem:[%s7] sm:$0x1f]
        %v499 = vpack.c.bf16 %v497, %v496
        %v500 = vld [vmem:[%s5] sm:$0xf]
        %v501 = vlaneseq
        %v502 = vshrl.u32 %v501, 7
        %v503 = vsub.s32 3, %v502
        %v504 = vrot.slane %v498, %v503
        %v506 = vsel %vm344, %v499, 0
        %v509 = vsel %vm348, %v500, 0
        %511 = vmatprep.subr.bf16.mxu0 0
        %512 = vmatpush1.bf16.msra.mxu0 %v509
        %513 = vmatprep.subr.bf16.mxu0 0
        %514 = vmatpush1.bf16.msra.mxu0 0
        %515 = vmatprep.subr.bf16.mxu0 0
        %516 = vmatpush1.bf16.msra.mxu0 0
        %517 = vmatprep.subr.bf16.mxu0 0
        %518 = vmatpush1.bf16.msra.mxu0 0
        %519 = vmatprep.subr.bf16.mxu0 0
        %520 = vmatpush1.bf16.msra.mxu0 0
        %521 = vmatprep.subr.bf16.mxu0 0
        %522 = vmatpush1.bf16.msra.mxu0 0
        %523 = vmatprep.subr.bf16.mxu0 0
        %524 = vmatpush1.bf16.msra.mxu0 0
        %525 = vmatprep.subr.bf16.mxu0 0
        %526 = vmatpush1.bf16.msra.mxu0 0
        %527 = vmatprep.subr.bf16.mxu0 0
        %528 = vmatpush1.bf16.msra.mxu0 0
        %529 = vmatprep.subr.bf16.mxu0 0
        %530 = vmatpush1.bf16.msra.mxu0 0
        %531 = vmatprep.subr.bf16.mxu0 0
        %532 = vmatpush1.bf16.msra.mxu0 0
        %533 = vmatprep.subr.bf16.mxu0 0
        %534 = vmatpush1.bf16.msra.mxu0 0
        %535 = vmatprep.subr.bf16.mxu0 0
        %536 = vmatpush1.bf16.msra.mxu0 0
        %537 = vmatprep.subr.bf16.mxu0 0
        %538 = vmatpush1.bf16.msra.mxu0 0
        %539 = vmatprep.subr.bf16.mxu0 0
        %540 = vmatpush1.bf16.msra.mxu0 0
        %541 = vmatprep.subr.bf16.mxu0 0
        %542 = vmatpush1.bf16.msra.mxu0 0
        %543 = vmatprep.mubr.bf16.mxu0 0
        %544 = vmatmul.mubr.bf16.gmra.mrb[0].mxu0 %v506
        %v545 = vpop.f32.mrb[0].mxu0
        %v546 = vadd.f32 %v504, %v545
        %v547 = vpop.f32.mrb[0].mxu0
        %v548 = vpop.f32.mrb[0].mxu0
        %v549 = vadd.f32 %v504, %v548
        %v550 = vpop.f32.mrb[0].mxu0
        %551 = vdwg.mxu0
        %v552 = vmax.f32 %v546, 0.0
        %v553 = vmax.f32 %v549, 0.0
        %v554 = vmin.f32 %v552, 6.0
        %v555 = vmin.f32 %v553, 6.0
        %556 = vst.msk [vmem:[#allocation2 + $0x1] sm:$0xff] %vm397, %v554
        %557 = vst.msk [vmem:[#allocation2 + $0x9] sm:$0xff] %vm397, %v555
        %v558 = vld [vmem:[#allocation2] ss:$2 sm:$0xff]
        %s559 = scalar_lea.vmem [#allocation2], 1
        %v560 = vld [vmem:[%s559] ss:$2 sm:$0xff]
        %s561 = scalar_lea.vmem [#allocation2], 2
        %v562 = vld [vmem:[%s561] ss:$2 sm:$0xff]
        %v563 = vlaneseq
        %v564 = vshrl.u32 %v563, 7
        %v565 = vsub.s32 0, %v564
        %v566 = vrot.slane %v498, %v565
        %v567 = vmul.f32 %v558, %v566
        %v568 = vlaneseq
        %v569 = vshrl.u32 %v568, 7
        %v570 = vsub.s32 1, %v569
        %v571 = vrot.slane %v498, %v570
        %v572 = vmul.f32 %v560, %v571
        %v573 = vadd.f32 %v567, %v572
        %v574 = vlaneseq
        %v575 = vshrl.u32 %v574, 7
        %v576 = vsub.s32 2, %v575
        %v577 = vrot.slane %v498, %v576
        %v578 = vmul.f32 %v562, %v577
        %v579 = vadd.f32 %v573, %v578
        %v580 = vlaneseq
        %v581 = vshrl.u32 %v580, 7
        %v582 = vsub.s32 4, %v581
        %v583 = vrot.slane %v498, %v582
        %v584 = vadd.f32 %v579, %v583
        %v585 = vmax.f32 %v584, 0.0
        %v586 = vmin.f32 %v585, 6.0
        %v587 = vpack.c.bf16 %v586, %v586
        %v588 = vld [vmem:[%s6] sm:$0xf]
        %v589 = vld [vmem:[%s6 + $0x4] sm:$0xf]
        %v590 = vld [vmem:[%s8] sm:$0x1]
        %v592 = vlaneseq
        %v593 = vshrl.u32 %v592, 7
        %v594 = vsub.s32 0, %v593
        %v595 = vrot.slane %v590, %v594
        %v599 = vunpack.c.l.b16 %v588
        %v600 = vunpack.c.l.b16 %v589
        %v601 = vpack.c.b16 %v600, %v599
        %v604 = vsel %vm397, %v587, 0
        %606 = vmatprep.subr.bf16.mxu0 0
        %607 = vmatpush1.bf16.msra.mxu0 %v601
        %608 = vmatprep.subr.bf16.mxu0 0
        %609 = vmatpush1.bf16.msra.mxu0 0
        %610 = vmatprep.subr.bf16.mxu0 0
        %611 = vmatpush1.bf16.msra.mxu0 0
        %612 = vmatprep.subr.bf16.mxu0 0
        %613 = vmatpush1.bf16.msra.mxu0 0
        %614 = vmatprep.subr.bf16.mxu0 0
        %615 = vmatpush1.bf16.msra.mxu0 0
        %616 = vmatprep.subr.bf16.mxu0 0
        %617 = vmatpush1.bf16.msra.mxu0 0
        %618 = vmatprep.subr.bf16.mxu0 0
        %619 = vmatpush1.bf16.msra.mxu0 0
        %620 = vmatprep.subr.bf16.mxu0 0
        %621 = vmatpush1.bf16.msra.mxu0 0
        %622 = vmatprep.subr.bf16.mxu0 0
        %623 = vmatpush1.bf16.msra.mxu0 0
        %624 = vmatprep.subr.bf16.mxu0 0
        %625 = vmatpush1.bf16.msra.mxu0 0
        %626 = vmatprep.subr.bf16.mxu0 0
        %627 = vmatpush1.bf16.msra.mxu0 0
        %628 = vmatprep.subr.bf16.mxu0 0
        %629 = vmatpush1.bf16.msra.mxu0 0
        %630 = vmatprep.subr.bf16.mxu0 0
        %631 = vmatpush1.bf16.msra.mxu0 0
        %632 = vmatprep.subr.bf16.mxu0 0
        %633 = vmatpush1.bf16.msra.mxu0 0
        %634 = vmatprep.subr.bf16.mxu0 0
        %635 = vmatpush1.bf16.msra.mxu0 0
        %636 = vmatprep.subr.bf16.mxu0 0
        %637 = vmatpush1.bf16.msra.mxu0 0
        %638 = vmatprep.mubr.bf16.mxu0 0
        %639 = vmatmul.mubr.bf16.gmra.mrb[0].mxu0 %v604
        %v640 = vpop.f32.mrb[0].mxu0
        %v641 = vadd.f32 %v595, %v640
        %v642 = vpop.f32.mrb[0].mxu0
        %v643 = vpop.f32.mrb[0].mxu0
        %v644 = vpop.f32.mrb[0].mxu0
        %645 = vdwg.mxu0
        %646 = vst.msk [vmem:[%s325] sm:$0xff] %vm344, %v641
        %s647 = sand.u32 %s225, 1
        %s648 = scalar_lea.sflag [#allocation4], %s647
        %s649 = sand.u32 %s225, 1
        %s650 = smul.addr %s649, 8
        %s651 = scalar_lea.vmem [#allocation3], %s650
        // Predicated region
        $region57: #{tpu_custom_call.1} parent=55 // pred_check
          %p652 = pneg %p235
        $region58: #{tpu_custom_call.1} parent=55 // pred_check_branch
          %654 = sbr.rel (%p652) target = $region60
        $region59: #{tpu_custom_call.1} parent=55 // pred_region
          %s656 = ssub.s32 128, 128
          %657 = vsyncadd %s648, %s656
          %s658 = smul.addr %s23, 128
          %s659 = scalar_lea.hbm %s9, %s658
          %s661 = sshll.u32 %s651, 4
          %s662 = int_to_ptr.vmem [resolvable:$true] %s661
          %664 = dma.vmem_to_hbm [thread:$0]  %s662, 128, %s659, %s648
        $region60: #{tpu_custom_call.1} parent=55 // pred_fallthru
          _
      $region56: #{tpu_custom_call.1} parent=5 // pred_fallthru
        _
      %p665 = scmp.le.s32.totalorder 2, %s18
      // Predicated region
      $region61: #{tpu_custom_call.1} parent=5 // pred_check
        %p666 = pneg %p665
      $region62: #{tpu_custom_call.1} parent=5 // pred_check_branch
        %668 = sbr.rel (%p666) target = $region64
      $region63: #{tpu_custom_call.1} parent=5 // pred_region
        %s669 = ssub.s32 %s18, 2
        // Predicated region
        $region65: #{tpu_custom_call.1} parent=63 // pred_check
          %p670 = pneg %p241
        $region66: #{tpu_custom_call.1} parent=63 // pred_check_branch
          %672 = sbr.rel (%p670) target = $region68
        $region67: #{tpu_custom_call.1} parent=63 // pred_region
          %s673 = sand.u32 %s226, 1
          %s674 = scalar_lea.sflag [#allocation4], %s673
          %s675 = sand.u32 %s226, 1
          %s676 = smul.addr %s675, 8
          %s677 = scalar_lea.vmem [#allocation3], %s676
          %678 = dma.done %s674, 128
        $region68: #{tpu_custom_call.1} parent=63 // pred_fallthru
          _
      $region64: #{tpu_custom_call.1} parent=5 // pred_fallthru
        _
    $region6: #{tpu_custom_call.1} parent=1 // loop_footer
      %s22 = sadd.s32 1, %s18
    $region7: #{tpu_custom_call.1} parent=1 // loop_footer_branch
      %17 = sbr.rel target = $region3
    $region8: #{tpu_custom_call.1} parent=1 // loop_exit
      _
    %679 = vsyncpa [#allocation4], 1
    %s680 = scalar_lea.sflag [#allocation4], 1
    %681 = vsyncpa %s680, 1

</llo_original>
